<compile_context>
chip_gen: v6e
topology: v6e:2x2x1
jax: 0.10.0
libtpu: 0.0.40
codegen_flags: <defaults>
</compile_context>

<pallas_src>
import jax
import jax.numpy as jnp
from jax import lax
from jax.experimental import pallas as pl
from jax.experimental.pallas import tpu as pltpu


def _mul_kernel(x_ref, s_ref, o_ref):
    # x_ref: (BR, BL) tile; s_ref: (BR, 1) per-row f32 scale.  Broadcast multiply
    # on the VPU in f32, one cast back to the output dtype.  Kernel is HBM-bound.
    o_ref[...] = (x_ref[...].astype(jnp.float32) * s_ref[...]).astype(o_ref.dtype)


def _sublane_factor(dtype):
    """Native packed sublane tile: 8 rows for 32-bit, 16 for bf16/fp16, 32 for int8/fp8."""
    itemsize = jnp.dtype(dtype).itemsize
    return 8 * max(1, 4 // itemsize)


def _choose_blocks(rows, cols, itemsize, sublane, target_bytes):
    """Pick (row_block, lane_block) so each grid step moves ~target_bytes."""
    # Lane (last-dim) block: full extent if one packed row-group of it fits the
    # budget, otherwise a large multiple of 128 (unmasked vst).
    if sublane * cols * itemsize <= target_bytes:
        bl = cols
    else:
        bl = max(128, (target_bytes // (sublane * itemsize)) // 128 * 128)
    # Row (sublane) block: as many rows as fit; multiple of the packed sublane
    # tile unless it covers the full row extent.
    br = max(1, target_bytes // (bl * itemsize))
    if br >= rows:
        br = rows
    else:
        br = max(sublane, (br // sublane) * sublane)
    return int(br), int(bl)


def apply_channel_scale(x, scale_c, *, target_bytes=4 * 1024 * 1024, in_place=False):
    """out[n, c, h, w] = x[n, c, h, w] * scale_c[c] via a lane-dense Pallas kernel."""
    N, C, H, W = x.shape
    NC = N * C
    sublane = _sublane_factor(x.dtype)
    scale_c = scale_c.astype(jnp.float32)

    if NC < sublane and W >= 128:
        # Few (batch, channel) rows (e.g. single RGB image): fold H into the row
        # axis so sublanes are fully occupied instead of 3/8-populated vregs.
        rows, cols = NC * H, W
        s_rows = jnp.repeat(jnp.tile(scale_c, N), H)
    else:
        rows, cols = NC, H * W
        s_rows = jnp.tile(scale_c, N)

    x2 = x.reshape(rows, cols)          # free view for default row-major layout
    s2 = s_rows.reshape(rows, 1)        # per-row f32 scale

    br, bl = _choose_blocks(rows, cols, x.dtype.itemsize, sublane, target_bytes)
    grid = (pl.cdiv(rows, br), pl.cdiv(cols, bl))

    # 2x double-buffered input blocks + 2x output blocks + scale + slack,
    # floored at 32 MiB (safe: v5e/v6e have 128 MiB physical, v7x has 64 MiB).
    block_bytes = br * bl * x.dtype.itemsize
    needed = 4 * block_bytes + 4 * br * 4 + (2 << 20)
    vmem_limit = int(min(max(needed, 32 << 20), 48 << 20))

    out2 = pl.pallas_call(
        _mul_kernel,
        out_shape=jax.ShapeDtypeStruct((rows, cols), x.dtype),
        grid=grid,
        in_specs=[
            pl.BlockSpec((br, bl), lambda i, j: (i, j)),   # x tile
            pl.BlockSpec((br, 1), lambda i, j: (i, 0)),    # per-row scale
        ],
        out_specs=pl.BlockSpec((br, bl), lambda i, j: (i, j)),
        compiler_params=pltpu.CompilerParams(
            dimension_semantics=("parallel", "parallel"),
            vmem_limit_bytes=vmem_limit,
        ),
        input_output_aliases=({0: 0} if in_place else {}),
    )(x2, s2)
    return out2.reshape(N, C, H, W)


def _draw_channel_scale(key, n_channels, min_magnitude, max_magnitude,
                        positive=True, negative=True):
    """Mirror of the PyTorch random-value logic (without the p gate); returns (C,) f32."""
    min_m = jnp.atleast_1d(jnp.asarray(min_magnitude, jnp.float32))
    max_m = jnp.atleast_1d(jnp.asarray(max_magnitude, jnp.float32))
    assert min_m.shape == max_m.shape, "min/max magnitude lengths must match"
    n = min_m.shape[0]
    assert n in (1, n_channels), "magnitude length must be 1 or num channels"

    k_val, k_sign = jax.random.split(key)
    val = jax.random.uniform(k_val, (n,)) * (max_m - min_m) + min_m
    if positive and negative:
        val = val * jnp.sign(jax.random.uniform(k_sign, (n,)) - 0.5)
    elif positive and not negative:
        val = jnp.abs(val)
    elif negative and not positive:
        val = -jnp.abs(val)
    if n == 1:
        val = jnp.broadcast_to(val, (n_channels,))
    return val


def random_multiply(x, key, min_magnitude=-1.0, max_magnitude=1.0,
                    positive=True, negative=True, p=0.5, *, in_place=False):
    """Full Random_multiply forward: gated random per-channel scale + Pallas multiply.

    The (1-p) branch skips the kernel (and its full HBM read+write) entirely.
    """
    k_gate, k_val = jax.random.split(key)
    gate = jax.random.uniform(k_gate, ()) < p          # torch.rand(1) < p
    scale_c = _draw_channel_scale(k_val, x.shape[1], min_magnitude, max_magnitude,
                                  positive, negative)
    return lax.cond(
        gate,
        lambda xx: apply_channel_scale(xx, scale_c, in_place=in_place),
        lambda xx: xx,
        x,
    )


if __name__ == "__main__":
    key = jax.random.PRNGKey(0)
    kx, k1, k2, k3 = jax.random.split(key, 4)

    # Case 0: fixed per-channel scale, standard (NC, HW) path.
    N, C, H, W = 2, 4, 16, 16
    x = jax.random.normal(kx, (N, C, H, W), dtype=jnp.float32) * 3.0 + 1.0
    scale = jnp.array([0.5, -1.25, 2.0, 3.5], dtype=jnp.float32)
    out0 = jax.block_until_ready(apply_channel_scale(x, scale))
    assert out0.shape == x.shape and out0.dtype == x.dtype
    assert jnp.allclose(out0, x * scale[None, :, None, None], atol=1e-6, rtol=1e-6), \
        "fixed-scale mismatch"

    # Case 1: full random path, per-channel magnitudes, positive-only, p = 1.0.
    mins, maxs = (0.5, 0.6, 0.7, 0.8), (1.0, 1.1, 1.2, 1.3)
    out1 = jax.block_until_ready(
        random_multiply(x, k1, mins, maxs, positive=True, negative=False, p=1.0))
    _, k1_val = jax.random.split(k1)
    s1 = _draw_channel_scale(k1_val, C, mins, maxs, positive=True, negative=False)
    assert jnp.allclose(out1, x * s1[None, :, None, None], atol=1e-6, rtol=1e-6), \
        "random p=1 mismatch"

    # Case 2: gate-off path, p = 0.0 -> identity (kernel skipped via lax.cond).
    out2 = jax.block_until_ready(random_multiply(x, k2, -1.0, 1.0, True, True, 0.0))
    assert jnp.array_equal(out2, x), "p=0 path must be identity"

    # Case 3: NC < sublane fallback layout (single 3-channel image, W >= 128).
    x3 = jax.random.normal(k3, (1, 3, 8, 128), dtype=jnp.float32)
    s3 = jnp.array([2.0, -0.5, 0.25], dtype=jnp.float32)
    out3 = jax.block_until_ready(apply_channel_scale(x3, s3))
    assert jnp.allclose(out3, x3 * s3[None, :, None, None], atol=1e-6, rtol=1e-6), \
        "fallback-layout mismatch"

    print("KERNEL_OK")
</pallas_src>

<mosaic_0001>
module attributes {stable_mosaic.version = 11 : i64} {
  func.func @_mul_kernel(%arg0: i32, %arg1: i32, %arg2: memref<8x256xf32, #tpu.memory_space<vmem>>, %arg3: memref<8x1xf32, #tpu.memory_space<vmem>>, %arg4: memref<8x256xf32, #tpu.memory_space<vmem>>) attributes {dimension_semantics = [#tpu.dimension_semantics<parallel>, #tpu.dimension_semantics<parallel>], iteration_bounds = array<i64: 1, 1>, scalar_prefetch = 0 : i64, scratch_operands = 0 : i64, tpu.core_type = #tpu.core_type<tc>, window_params = [{transform_indices = @transform_0, window_bounds = array<i64: 8, 256>}, {transform_indices = @transform_1, window_bounds = array<i64: 8, 1>}, {transform_indices = @transform_2, window_bounds = array<i64: 8, 256>}]} {
    %c0 = arith.constant 0 : index
    %c0_0 = arith.constant 0 : index
    %0 = vector.load %arg2[%c0, %c0_0] : memref<8x256xf32, #tpu.memory_space<vmem>>, vector<8x256xf32>
    %c0_1 = arith.constant 0 : index
    %c0_2 = arith.constant 0 : index
    %1 = vector.load %arg3[%c0_1, %c0_2] : memref<8x1xf32, #tpu.memory_space<vmem>>, vector<8x1xf32>
    %2 = vector.broadcast %1 : vector<8x1xf32> to vector<8x256xf32>
    %3 = arith.mulf %0, %2 : vector<8x256xf32>
    %c0_3 = arith.constant 0 : index
    %c0_4 = arith.constant 0 : index
    %4 = vector.load %arg4[%c0_3, %c0_4] : memref<8x256xf32, #tpu.memory_space<vmem>>, vector<8x256xf32>
    tpu.vector_store %arg4[%c0_3, %c0_4], %3 {strides = array<i32>} : memref<8x256xf32, #tpu.memory_space<vmem>>, vector<8x256xf32>,
    return
  }
  func.func @transform_0(%arg0: i32, %arg1: i32) -> (i32, i32) {
    %c0_i32 = arith.constant 0 : i32
    return %arg0, %arg1 : i32, i32
  }
  func.func @transform_1(%arg0: i32, %arg1: i32) -> (i32, i32) {
    %c0_i32 = arith.constant 0 : i32
    %c0_i32_0 = arith.constant 0 : i32
    return %arg0, %c0_i32 : i32, i32
  }
  func.func @transform_2(%arg0: i32, %arg1: i32) -> (i32, i32) {
    %c0_i32 = arith.constant 0 : i32
    return %arg0, %arg1 : i32, i32
  }
}

</mosaic_0001>

<llo_original>
// kernel: tpu_custom_call.1
$region0: #{tpu_custom_call.1}
  #allocation0 [shape = 'u32[]', space=smem, size = 0x4, offset = 0x4, fixed_abs, tag = 'smem constant byte address 0x4 - core index']
  #allocation1 [shape = 'u32[144,128]{1,0:T(1,128)}', space=vmem, size = 0x12000, scoped, tag = 'internal scratch']
  %s0 = inlined_call_operand.hbm [shape: f32[8,256], index: 0, kind: input, shape index: {}]
  %s1 = inlined_call_operand.vmem [shape: f32[8,1], index: 1, kind: input, shape index: {}]
  %s2 = inlined_call_operand.hbm [shape: f32[8,256], index: 2, kind: output, shape index: {}]
  %s3 = sld [smem:[#allocation0]]
  $region22: #{tpu_custom_call.1} parent=0
    _
  %s5 = ssub.s32 1, %s3
  %s6 = scalar_select 0, %s5, %s3
  $region1: #{tpu_custom_call.1} parent=0
    #allocation2 [shape = 'u8[8192]{0}', space=vmem, size = 0x2000, scoped, tag = 'input window, operand 0, single buffered']
    #allocation3 [shape = 's32[1]{0}', space=sflag, size = 0x4, scoped, tag = 'scoped memory for tpu_custom_call.1']
    #allocation4 [shape = 's32[1]{0}', space=sflag, size = 0x4, scoped, tag = 'scoped memory for tpu_custom_call.1']
    #allocation5 [shape = 'u8[8192]{0}', space=vmem, size = 0x2000, scoped, tag = 'output window, operand 0, single buffered']
    %7 = vsyncpa [#allocation3], 0
    %8 = vsyncpa [#allocation4], 0
    // Predicated region
    $region2: #{tpu_custom_call.1} parent=1 // pred_check
      _
    $region3: #{tpu_custom_call.1} parent=1 // pred_check_branch
      %10 = sbr.rel (0) target = $region5
    $region4: #{tpu_custom_call.1} parent=1 // pred_region
      %s12 = ssub.s32 256, 256
      %13 = vsyncadd [#allocation3], %s12
      %s15 = sshll.u32 [#allocation2], 4
      %s16 = int_to_ptr.vmem [resolvable:$true] %s15
      %18 = dma.hbm_to_vmem [thread:$0]  %s0, 256, %s16, [#allocation3]
    $region5: #{tpu_custom_call.1} parent=1 // pred_fallthru
      _
    // Predicated region
    $region6: #{tpu_custom_call.1} parent=1 // pred_check
      _
    $region7: #{tpu_custom_call.1} parent=1 // pred_check_branch
      %20 = sbr.rel (0) target = $region9
    $region8: #{tpu_custom_call.1} parent=1 // pred_region
      _
    $region9: #{tpu_custom_call.1} parent=1 // pred_fallthru
      _
    // Predicated region
    $region10: #{tpu_custom_call.1} parent=1 // pred_check
      _
    $region11: #{tpu_custom_call.1} parent=1 // pred_check_branch
      %22 = sbr.rel (0) target = $region13
    $region12: #{tpu_custom_call.1} parent=1 // pred_region
      %23 = dma.done [#allocation3], 256
    $region13: #{tpu_custom_call.1} parent=1 // pred_fallthru
      _
    %v24 = vld [vmem:[#allocation2] sm:$0xff]
    %v25 = vld [vmem:[#allocation2 + $0x8] sm:$0xff]
    %v26 = vld [vmem:[%s1] sm:$0xff]
    %28 = vset.pattern.permute.xlu0 0
    %29 = vperm.xlu0 %28, %v26
    %v30 = vpop.permute.xlu0 %29
    %v32 = vmul.f32 %v24, %v30
    %v33 = vmul.f32 %v25, %v30
    %34 = vst [vmem:[#allocation5] sm:$0xff] %v32
    %35 = vst [vmem:[#allocation5 + $0x8] sm:$0xff] %v33
    // Predicated region
    $region14: #{tpu_custom_call.1} parent=1 // pred_check
      _
    $region15: #{tpu_custom_call.1} parent=1 // pred_check_branch
      %37 = sbr.rel (0) target = $region17
    $region16: #{tpu_custom_call.1} parent=1 // pred_region
      %s39 = ssub.s32 256, 256
      %40 = vsyncadd [#allocation4], %s39
      %s42 = sshll.u32 [#allocation5], 4
      %s43 = int_to_ptr.vmem [resolvable:$true] %s42
      %45 = dma.vmem_to_hbm [thread:$0]  %s43, 256, %s2, [#allocation4]
    $region17: #{tpu_custom_call.1} parent=1 // pred_fallthru
      _
    // Predicated region
    $region18: #{tpu_custom_call.1} parent=1 // pred_check
      _
    $region19: #{tpu_custom_call.1} parent=1 // pred_check_branch
      %47 = sbr.rel (0) target = $region21
    $region20: #{tpu_custom_call.1} parent=1 // pred_region
      %48 = dma.done [#allocation4], 256
    $region21: #{tpu_custom_call.1} parent=1 // pred_fallthru
      _
    %49 = vsyncpa [#allocation3], 1
    %50 = vsyncpa [#allocation4], 1

</llo_original>
